<compile_context>
chip_gen: v7x
topology: tpu7x:2x2x1
jax: 0.10.0
libtpu: 0.0.40
codegen_flags: <defaults>
</compile_context>

<pallas_src>
import functools

import jax
import jax.numpy as jnp
from jax.experimental import pallas as pl
from jax.experimental.pallas import tpu as pltpu


def _moments_kernel(w_ref, p_ref, sum_ref, sq_ref):
    # w_ref : (Cout_p, K*K*Cin)   bf16 im2col-ordered weights (channel pad is VMEM-only)
    # p_ref : (1, K*K*Cin, TH*Wo) bf16 im2col row tile (spatial on lanes)
    # sum_ref/sq_ref : (1, 1, Cout_p, 1) f32 per-tile channel sum / sum-of-squares
    acc = jnp.dot(w_ref[...], p_ref[0],
                  preferred_element_type=jnp.float32)          # (Cout_p, TH*Wo) f32
    s = jnp.sum(acc, axis=1, keepdims=True)                    # (Cout_p, 1)
    q = jnp.sum(acc * acc, axis=1, keepdims=True)              # (Cout_p, 1)
    sum_ref[...] = s.reshape(1, 1, s.shape[0], 1)
    sq_ref[...] = q.reshape(1, 1, q.shape[0], 1)


def _conv_bn_relu_kernel(w_ref, p_ref, scale_ref, shift_ref, o_ref, *, Cout):
    # Recompute the conv tile and fuse BN affine + ReLU; the activation is written to
    # HBM exactly once, unpadded, with channels on sublanes / spatial on lanes (NCHW).
    acc = jnp.dot(w_ref[...], p_ref[0],
                  preferred_element_type=jnp.float32)          # (Cout_p, TH*Wo) f32
    y = acc[:Cout, :] * scale_ref[...] + shift_ref[...]        # (Cout,  TH*Wo) f32
    o_ref[0] = jnp.maximum(y, 0.0)


def _pick_row_tile(Ho, Wo):
    # Smallest divisor of Ho whose tile TH*Wo is lane-dense (%128 == 0) and >= 256
    # (fills the 256-wide MXU on v6e/v7x).
    for d in range(1, Ho + 1):
        if Ho % d == 0 and (d * Wo) % 128 == 0 and d * Wo >= 256:
            return d
    # TODO(synk): fallback is a single untiled spatial block; for very large Ho*Wo,
    #             re-derive against the per-generation VMEM budget (v7x: 64 MiB).
    return Ho


def conv_bn_relu(x_nchw, w_oihw, gamma, beta, *, stride=1, eps=1e-5,
                 mxu_dtype=jnp.bfloat16):
    """Forward pass of ConvBNReLU. x_nchw: (N, Cin, H, W). Returns (N, Cout, Ho, Wo)."""
    N, Cin, H, W = x_nchw.shape
    Cout, Cin_w, K, K2 = w_oihw.shape
    assert Cin_w == Cin and K == K2
    pad = K // 2                        # matches nn.Conv2d(padding=kernel_size // 2)
    S = stride
    Ho = (H + 2 * pad - K) // S + 1
    Wo = (W + 2 * pad - K) // S + 1
    KKC = K * K * Cin
    Cout_p = ((Cout + 127) // 128) * 128            # VMEM-only channel padding
    TH = _pick_row_tile(Ho, Wo)
    n_hb = Ho // TH
    THW = TH * Wo

    # ---- XLA-side layout glue (done once, fused with the transpose/pad/cast) ----------
    x_nhwc = jnp.transpose(x_nchw, (0, 2, 3, 1))
    xp = jnp.pad(x_nhwc, ((0, 0), (pad, pad), (pad, pad), (0, 0))).astype(mxu_dtype)
    cols = []
    for kh in range(K):
        for kw in range(K):
            cols.append(xp[:, kh:kh + S * (Ho - 1) + 1:S,
                           kw:kw + S * (Wo - 1) + 1:S, :])          # (N, Ho, Wo, Cin)
    im2col = jnp.stack(cols, axis=3).reshape(N, Ho * Wo, KKC)       # (kh,kw) major, cin minor
    im2col = jnp.transpose(im2col, (0, 2, 1))                       # (N, K*K*Cin, Ho*Wo)

    w2d = jnp.transpose(w_oihw, (0, 2, 3, 1)).reshape(Cout, KKC)    # matching (kh,kw,cin) order
    w2d = jnp.pad(w2d, ((0, Cout_p - Cout), (0, 0))).astype(mxu_dtype)

    w_spec = pl.BlockSpec((Cout_p, KKC), lambda n, j: (0, 0))
    p_spec = pl.BlockSpec((1, KKC, THW), lambda n, j: (n, 0, j))
    mom_spec = pl.BlockSpec((1, 1, Cout_p, 1), lambda n, j: (n, j, 0, 0))
    params = pltpu.CompilerParams(dimension_semantics=("parallel", "parallel"))

    # ---- Stage 1 (Pallas): per-tile channel moments only; no activation writeback -----
    csum, csq = pl.pallas_call(
        _moments_kernel,
        out_shape=(jax.ShapeDtypeStruct((N, n_hb, Cout_p, 1), jnp.float32),
                   jax.ShapeDtypeStruct((N, n_hb, Cout_p, 1), jnp.float32)),
        grid=(N, n_hb),
        in_specs=[w_spec, p_spec],
        out_specs=(mom_spec, mom_spec),
        compiler_params=params,
    )(w2d, im2col)

    # ---- Stage 2 (tiny JAX glue): fold biased batch stats + gamma/beta into scale/shift
    cnt = jnp.float32(N * Ho * Wo)
    ch_sum = jnp.sum(csum, axis=(0, 1, 3))[:Cout]
    ch_sq = jnp.sum(csq, axis=(0, 1, 3))[:Cout]
    mean = ch_sum / cnt
    # Clamp guards the E[x^2] - mean^2 form against f32 cancellation going negative.
    var = jnp.maximum(ch_sq / cnt - mean * mean, 0.0)
    inv_std = jax.lax.rsqrt(var + eps)
    g = gamma.astype(jnp.float32)
    b = beta.astype(jnp.float32)
    scale = (g * inv_std).reshape(Cout, 1)
    shift = (b - mean * g * inv_std).reshape(Cout, 1)

    # ---- Stage 3 (Pallas): conv recompute fused with BN + ReLU, single unpadded write --
    out = pl.pallas_call(
        functools.partial(_conv_bn_relu_kernel, Cout=Cout),
        out_shape=jax.ShapeDtypeStruct((N, Cout, Ho * Wo), jnp.float32),
        grid=(N, n_hb),
        in_specs=[w_spec, p_spec,
                  pl.BlockSpec((Cout, 1), lambda n, j: (0, 0)),
                  pl.BlockSpec((Cout, 1), lambda n, j: (0, 0))],
        out_specs=pl.BlockSpec((1, Cout, THW), lambda n, j: (n, 0, j)),
        compiler_params=params,
    )(w2d, im2col, scale, shift)

    return out.reshape(N, Cout, Ho, Wo)      # metadata-only reshape: already NCHW layout


def _reference(x_nchw, w_oihw, gamma, beta, *, stride=1, eps=1e-5):
    """Pure-JAX reference with identical semantics (for validation)."""
    K = w_oihw.shape[-1]
    pad = K // 2
    conv = jax.lax.conv_general_dilated(
        x_nchw, w_oihw, window_strides=(stride, stride),
        padding=((pad, pad), (pad, pad)),
        dimension_numbers=("NCHW", "OIHW", "NCHW"),
        precision=jax.lax.Precision.HIGHEST)
    mean = jnp.mean(conv, axis=(0, 2, 3), keepdims=True)
    var = jnp.mean(jnp.square(conv - mean), axis=(0, 2, 3), keepdims=True)
    g = gamma.reshape(1, -1, 1, 1)
    b = beta.reshape(1, -1, 1, 1)
    y = (conv - mean) * jax.lax.rsqrt(var + eps) * g + b
    return jnp.maximum(y, 0.0)


if __name__ == "__main__":
    # Module config: ConvBNReLU(in_channels=4, out_channels=8, kernel_size=3, stride=1)
    N, Cin, H, W = 2, 4, 16, 16
    Cout, K, stride = 8, 3, 1

    key = jax.random.PRNGKey(0)
    kx, kw = jax.random.split(key)
    x = jax.random.normal(kx, (N, Cin, H, W), dtype=jnp.float32)
    # Conv2d(bias=False) weight; BN affine at PyTorch defaults (weight=1, bias=0).
    w = jax.random.normal(kw, (Cout, Cin, K, K), dtype=jnp.float32) * 0.1
    gamma = jnp.ones((Cout,), dtype=jnp.float32)
    beta = jnp.zeros((Cout,), dtype=jnp.float32)

    fwd = jax.jit(functools.partial(conv_bn_relu, stride=stride))
    out = jax.block_until_ready(fwd(x, w, gamma, beta))

    # Validate against a pure-JAX reference on the same bf16-rounded operands
    # (the bf16 MXU input cast is the kernel's only approximation; accumulation is f32).
    x_r = x.astype(jnp.bfloat16).astype(jnp.float32)
    w_r = w.astype(jnp.bfloat16).astype(jnp.float32)
    ref = _reference(x_r, w_r, gamma, beta, stride=stride)

    assert out.shape == (N, Cout, H, W)
    err = float(jnp.max(jnp.abs(out - ref)))
    assert err < 1e-3, err

    print("KERNEL_OK")
</pallas_src>

<mosaic_0001>
module attributes {stable_mosaic.version = 11 : i64} {
  func.func @_moments_kernel(%arg0: i32, %arg1: i32, %arg2: memref<128x36xbf16, #tpu.memory_space<vmem>>, %arg3: memref<1x36x256xbf16, #tpu.memory_space<vmem>>, %arg4: memref<1x1x128x1xf32, #tpu.memory_space<vmem>>, %arg5: memref<1x1x128x1xf32, #tpu.memory_space<vmem>>) attributes {dimension_semantics = [#tpu.dimension_semantics<parallel>, #tpu.dimension_semantics<parallel>], iteration_bounds = array<i64: 2, 1>, scalar_prefetch = 0 : i64, scratch_operands = 0 : i64, tpu.core_type = #tpu.core_type<tc>, window_params = [{pipeline_mode = #tpu.pipeline_mode<synchronous>, transform_indices = @transform_0, window_bounds = array<i64: 128, 36>}, {transform_indices = @transform_1, window_bounds = array<i64: 1, 36, 256>}, {transform_indices = @transform_2, window_bounds = array<i64: 1, 1, 128, 1>}, {transform_indices = @transform_3, window_bounds = array<i64: 1, 1, 128, 1>}]} {
    %c0 = arith.constant 0 : index
    %c0_0 = arith.constant 0 : index
    %0 = vector.load %arg2[%c0, %c0_0] : memref<128x36xbf16, #tpu.memory_space<vmem>>, vector<128x36xbf16>
    %c0_1 = arith.constant 0 : index
    %c0_2 = arith.constant 0 : index
    %c0_3 = arith.constant 0 : index
    %1 = vector.load %arg3[%c0_1, %c0_2, %c0_3] : memref<1x36x256xbf16, #tpu.memory_space<vmem>>, vector<1x36x256xbf16>
    %2 = vector.shape_cast %1 : vector<1x36x256xbf16> to vector<36x256xbf16>
    %cst = arith.constant dense<0.000000e+00> : vector<128x256xf32>
    %3 = tpu.matmul %0, %2, %cst {dimension_numbers = #tpu.dot_dimension_numbers<[1], [0], [0], [1], [0, 0, 1, 1], [], []>} : vector<128x36xbf16>, vector<36x256xbf16>, vector<128x256xf32> -> vector<128x256xf32>
    %cst_4 = arith.constant dense<0.000000e+00> : vector<128xf32>
    %4 = vector.multi_reduction <add>, %3, %cst_4 [1] : vector<128x256xf32> to vector<128xf32>
    %5 = vector.shape_cast %4 : vector<128xf32> to vector<128x1xf32>
    %6 = arith.mulf %3, %3 : vector<128x256xf32>
    %cst_5 = arith.constant dense<0.000000e+00> : vector<128xf32>
    %7 = vector.multi_reduction <add>, %6, %cst_5 [1] : vector<128x256xf32> to vector<128xf32>
    %8 = vector.shape_cast %7 : vector<128xf32> to vector<128x1xf32>
    %9 = vector.shape_cast %5 : vector<128x1xf32> to vector<1x1x128x1xf32>
    %c0_6 = arith.constant 0 : index
    %c0_7 = arith.constant 0 : index
    %c0_8 = arith.constant 0 : index
    %c0_9 = arith.constant 0 : index
    %10 = vector.load %arg4[%c0_6, %c0_7, %c0_8, %c0_9] : memref<1x1x128x1xf32, #tpu.memory_space<vmem>>, vector<1x1x128x1xf32>
    tpu.vector_store %arg4[%c0_6, %c0_7, %c0_8, %c0_9], %9 {strides = array<i32>} : memref<1x1x128x1xf32, #tpu.memory_space<vmem>>, vector<1x1x128x1xf32>,
    %11 = vector.shape_cast %8 : vector<128x1xf32> to vector<1x1x128x1xf32>
    %c0_10 = arith.constant 0 : index
    %c0_11 = arith.constant 0 : index
    %c0_12 = arith.constant 0 : index
    %c0_13 = arith.constant 0 : index
    %12 = vector.load %arg5[%c0_10, %c0_11, %c0_12, %c0_13] : memref<1x1x128x1xf32, #tpu.memory_space<vmem>>, vector<1x1x128x1xf32>
    tpu.vector_store %arg5[%c0_10, %c0_11, %c0_12, %c0_13], %11 {strides = array<i32>} : memref<1x1x128x1xf32, #tpu.memory_space<vmem>>, vector<1x1x128x1xf32>,
    return
  }
  func.func @transform_0(%arg0: i32, %arg1: i32) -> (i32, i32) {
    %c0_i32 = arith.constant 0 : i32
    %c0_i32_0 = arith.constant 0 : i32
    %c0_i32_1 = arith.constant 0 : i32
    return %c0_i32, %c0_i32_0 : i32, i32
  }
  func.func @transform_1(%arg0: i32, %arg1: i32) -> (i32, i32, i32) {
    %c0_i32 = arith.constant 0 : i32
    %c0_i32_0 = arith.constant 0 : i32
    return %arg0, %c0_i32, %arg1 : i32, i32, i32
  }
  func.func @transform_2(%arg0: i32, %arg1: i32) -> (i32, i32, i32, i32) {
    %c0_i32 = arith.constant 0 : i32
    %c0_i32_0 = arith.constant 0 : i32
    %c0_i32_1 = arith.constant 0 : i32
    return %arg0, %arg1, %c0_i32, %c0_i32_0 : i32, i32, i32, i32
  }
  func.func @transform_3(%arg0: i32, %arg1: i32) -> (i32, i32, i32, i32) {
    %c0_i32 = arith.constant 0 : i32
    %c0_i32_0 = arith.constant 0 : i32
    %c0_i32_1 = arith.constant 0 : i32
    return %arg0, %arg1, %c0_i32, %c0_i32_0 : i32, i32, i32, i32
  }
}

module attributes {stable_mosaic.version = 11 : i64} {
  func.func @_conv_bn_relu_kernel(%arg0: i32, %arg1: i32, %arg2: memref<128x36xbf16, #tpu.memory_space<vmem>>, %arg3: memref<1x36x256xbf16, #tpu.memory_space<vmem>>, %arg4: memref<8x1xf32, #tpu.memory_space<vmem>>, %arg5: memref<8x1xf32, #tpu.memory_space<vmem>>, %arg6: memref<1x8x256xf32, #tpu.memory_space<vmem>>) attributes {dimension_semantics = [#tpu.dimension_semantics<parallel>, #tpu.dimension_semantics<parallel>], iteration_bounds = array<i64: 2, 1>, scalar_prefetch = 0 : i64, scratch_operands = 0 : i64, tpu.core_type = #tpu.core_type<tc>, window_params = [{pipeline_mode = #tpu.pipeline_mode<synchronous>, transform_indices = @transform_0, window_bounds = array<i64: 128, 36>}, {transform_indices = @transform_1, window_bounds = array<i64: 1, 36, 256>}, {pipeline_mode = #tpu.pipeline_mode<synchronous>, transform_indices = @transform_2, window_bounds = array<i64: 8, 1>}, {pipeline_mode = #tpu.pipeline_mode<synchronous>, transform_indices = @transform_3, window_bounds = array<i64: 8, 1>}, {transform_indices = @transform_4, window_bounds = array<i64: 1, 8, 256>}]} {
    %c0 = arith.constant 0 : index
    %c0_0 = arith.constant 0 : index
    %0 = vector.load %arg2[%c0, %c0_0] : memref<128x36xbf16, #tpu.memory_space<vmem>>, vector<128x36xbf16>
    %c0_1 = arith.constant 0 : index
    %c0_2 = arith.constant 0 : index
    %c0_3 = arith.constant 0 : index
    %1 = vector.load %arg3[%c0_1, %c0_2, %c0_3] : memref<1x36x256xbf16, #tpu.memory_space<vmem>>, vector<1x36x256xbf16>
    %2 = vector.shape_cast %1 : vector<1x36x256xbf16> to vector<36x256xbf16>
    %cst = arith.constant dense<0.000000e+00> : vector<128x256xf32>
    %3 = tpu.matmul %0, %2, %cst {dimension_numbers = #tpu.dot_dimension_numbers<[1], [0], [0], [1], [0, 0, 1, 1], [], []>} : vector<128x36xbf16>, vector<36x256xbf16>, vector<128x256xf32> -> vector<128x256xf32>
    %4 = vector.extract_strided_slice %3 {offsets = [0, 0], sizes = [8, 256], strides = [1, 1]} : vector<128x256xf32> to vector<8x256xf32>
    %c0_4 = arith.constant 0 : index
    %c0_5 = arith.constant 0 : index
    %5 = vector.load %arg4[%c0_4, %c0_5] : memref<8x1xf32, #tpu.memory_space<vmem>>, vector<8x1xf32>
    %6 = vector.broadcast %5 : vector<8x1xf32> to vector<8x256xf32>
    %7 = arith.mulf %4, %6 : vector<8x256xf32>
    %c0_6 = arith.constant 0 : index
    %c0_7 = arith.constant 0 : index
    %8 = vector.load %arg5[%c0_6, %c0_7] : memref<8x1xf32, #tpu.memory_space<vmem>>, vector<8x1xf32>
    %9 = vector.broadcast %8 : vector<8x1xf32> to vector<8x256xf32>
    %10 = arith.addf %7, %9 : vector<8x256xf32>
    %cst_8 = arith.constant 0.000000e+00 : f32
    %11 = vector.broadcast %cst_8 : f32 to vector<8x256xf32>
    %12 = arith.maximumf %10, %11 : vector<8x256xf32>
    %c0_9 = arith.constant 0 : index
    %c0_10 = arith.constant 0 : index
    %c0_11 = arith.constant 0 : index
    %13 = vector.load %arg6[%c0_9, %c0_10, %c0_11] : memref<1x8x256xf32, #tpu.memory_space<vmem>>, vector<1x8x256xf32>
    %14 = vector.shape_cast %13 : vector<1x8x256xf32> to vector<8x256xf32>
    %15 = vector.shape_cast %12 : vector<8x256xf32> to vector<1x8x256xf32>
    tpu.vector_store %arg6[%c0_9, %c0_10, %c0_11], %15 {strides = array<i32>} : memref<1x8x256xf32, #tpu.memory_space<vmem>>, vector<1x8x256xf32>,
    return
  }
  func.func @transform_0(%arg0: i32, %arg1: i32) -> (i32, i32) {
    %c0_i32 = arith.constant 0 : i32
    %c0_i32_0 = arith.constant 0 : i32
    %c0_i32_1 = arith.constant 0 : i32
    return %c0_i32, %c0_i32_0 : i32, i32
  }
  func.func @transform_1(%arg0: i32, %arg1: i32) -> (i32, i32, i32) {
    %c0_i32 = arith.constant 0 : i32
    %c0_i32_0 = arith.constant 0 : i32
    return %arg0, %c0_i32, %arg1 : i32, i32, i32
  }
  func.func @transform_2(%arg0: i32, %arg1: i32) -> (i32, i32) {
    %c0_i32 = arith.constant 0 : i32
    %c0_i32_0 = arith.constant 0 : i32
    %c0_i32_1 = arith.constant 0 : i32
    return %c0_i32, %c0_i32_0 : i32, i32
  }
  func.func @transform_3(%arg0: i32, %arg1: i32) -> (i32, i32) {
    %c0_i32 = arith.constant 0 : i32
    %c0_i32_0 = arith.constant 0 : i32
    %c0_i32_1 = arith.constant 0 : i32
    return %c0_i32, %c0_i32_0 : i32, i32
  }
  func.func @transform_4(%arg0: i32, %arg1: i32) -> (i32, i32, i32) {
    %c0_i32 = arith.constant 0 : i32
    %c0_i32_0 = arith.constant 0 : i32
    return %arg0, %c0_i32, %arg1 : i32, i32, i32
  }
}

</mosaic_0001>

<llo_original>
// kernel: conv_bn_relu.3
$region0: #{conv_bn_relu.3}
  #allocation0 [shape = 'u32[]', space=smem, size = 0x4, offset = 0x4, fixed_abs, tag = 'smem constant byte address 0x4 - core index']
  #allocation1 [shape = 'u32[144,128]{1,0:T(1,128)}', space=vmem, size = 0x12000, scoped, tag = 'internal scratch']
  %s0 = inlined_call_operand.vmem [shape: bf16[128,36], index: 0, kind: input, shape index: {}]
  %s1 = inlined_call_operand.vmem [shape: bf16[2,36,256], index: 1, kind: input, shape index: {}]
  %s2 = inlined_call_operand.vmem [shape: f32[8,1], index: 2, kind: input, shape index: {}]
  %s3 = inlined_call_operand.vmem [shape: f32[8,1], index: 3, kind: input, shape index: {}]
  %s4 = inlined_call_operand.vmem [shape: f32[2,8,256], index: 4, kind: output, shape index: {}]
  %s5 = sld [smem:[#allocation0]]
  $region49: #{conv_bn_relu.3} parent=0
    _
  %s7 = ssub.s32 1, %s5
  %s8 = scalar_select 0, %s7, %s5
  loop: start=0, step=1, limit=4
  $region2: #{conv_bn_relu.3} parent=0 // loop_pre_header
    _
  $region3: #{conv_bn_relu.3} parent=0 // loop_header
    %s10 = sphi 0, %s14
    %p11 = scmp.ge.s32.totalorder %s10, 4
    %s17 = sphi 0, %s29
    %s18 = sphi 0, %s25
    %s19 = sphi 0, %s17
    %s20 = sphi 0, %s18
    %s21 = sphi 0, %s19
    %s22 = sphi 0, %s20
    %s30 = sphi 0, %s30
    %s32 = sphi 0, %s30
    %s33 = sphi 0, %s32
    %s47 = sphi 0, %s33
    %s55 = sphi 0, %s57
    %s58 = sphi 0, %s55
    %s59 = sphi 0, %s58
    %s75 = sphi 0, %s59
    %s79 = sphi 0, %s79
    %s81 = sphi 0, %s79
    %s82 = sphi 0, %s81
    %s96 = sphi 0, %s82
    %s100 = sphi 0, %s100
    %s102 = sphi 0, %s100
    %s103 = sphi 0, %s102
    %s117 = sphi 0, %s103
    %s125 = sphi 0, %s127
    %s128 = sphi 0, %s125
    %s129 = sphi 0, %s128
    %s145 = sphi 0, %s129
  $region4: #{conv_bn_relu.3} parent=0 // loop_header_branch
    %13 = sbr.rel (%p11) target = $region8
  $region5: #{conv_bn_relu.3} parent=0 // loop_body
    %s15 = ssub.s32 %s10, 1
    %s16 = ssub.s32 %s10, 2
    %s23 = sadd.s32 1, %s18
    %p24 = scmp.ge.s32.totalorder %s23, 1
    %s25 = scalar_select %p24, 0, %s23
    %s26 = sadd.s32 1, %s17
    %s27 = scalar_select %p24, %s26, %s17
    %p28 = scmp.ge.s32.totalorder %s27, 2
    %s29 = scalar_select %p28, 0, %s27
    %s31 = sadd.s32 %s30, 1
    %p34 = scmp.eq.s32.totalorder %s10, 1
    %p35 = scmp.ne.s32.totalorder %s30, %s32
    %p36 = scmp.eq.s32.totalorder %s10, 0
    %p37 = por %p35, %p36
    %p38 = scmp.ne.s32.totalorder %s30, %s32
    %p39 = scmp.eq.s32.totalorder %s15, 1
    %p40 = por %p38, %p39
    %p41 = scmp.ne.s32.totalorder %s32, %s33
    %p42 = scmp.eq.s32.totalorder %s15, 0
    %p43 = por %p41, %p42
    %p44 = scmp.ne.s32.totalorder %s32, %s33
    %p45 = scmp.eq.s32.totalorder %s16, 1
    %p46 = por %p44, %p45
    %p48 = scmp.ne.s32.totalorder %s33, %s47
    %p49 = scmp.eq.s32.totalorder %s16, 0
    %p50 = por %p48, %p49
    %s51 = ssub.s32 %s17, %s29
    %s52 = ssub.s32 %s18, %s25
    %s53 = sor.u32 %s51, %s52
    %p54 = scmp.eq.s32.totalorder %s53, 0
    %s56 = sadd.s32 %s55, 1
    %s57 = scalar_select %p54, %s55, %s56
    %p60 = pneg %p54
    %p61 = scmp.eq.s32.totalorder %s10, 1
    %p62 = por %p60, %p61
    %p63 = scmp.ne.s32.totalorder %s55, %s58
    %p64 = scmp.eq.s32.totalorder %s10, 0
    %p65 = por %p63, %p64
    %p66 = scmp.ne.s32.totalorder %s55, %s58
    %p67 = scmp.eq.s32.totalorder %s15, 1
    %p68 = por %p66, %p67
    %p69 = scmp.ne.s32.totalorder %s58, %s59
    %p70 = scmp.eq.s32.totalorder %s15, 0
    %p71 = por %p69, %p70
    %p72 = scmp.ne.s32.totalorder %s58, %s59
    %p73 = scmp.eq.s32.totalorder %s16, 1
    %p74 = por %p72, %p73
    %p76 = scmp.ne.s32.totalorder %s59, %s75
    %p77 = scmp.eq.s32.totalorder %s16, 0
    %p78 = por %p76, %p77
    %s80 = sadd.s32 %s79, 1
    %p83 = scmp.eq.s32.totalorder %s10, 1
    %p84 = scmp.ne.s32.totalorder %s79, %s81
    %p85 = scmp.eq.s32.totalorder %s10, 0
    %p86 = por %p84, %p85
    %p87 = scmp.ne.s32.totalorder %s79, %s81
    %p88 = scmp.eq.s32.totalorder %s15, 1
    %p89 = por %p87, %p88
    %p90 = scmp.ne.s32.totalorder %s81, %s82
    %p91 = scmp.eq.s32.totalorder %s15, 0
    %p92 = por %p90, %p91
    %p93 = scmp.ne.s32.totalorder %s81, %s82
    %p94 = scmp.eq.s32.totalorder %s16, 1
    %p95 = por %p93, %p94
    %p97 = scmp.ne.s32.totalorder %s82, %s96
    %p98 = scmp.eq.s32.totalorder %s16, 0
    %p99 = por %p97, %p98
    %s101 = sadd.s32 %s100, 1
    %p104 = scmp.eq.s32.totalorder %s10, 1
    %p105 = scmp.ne.s32.totalorder %s100, %s102
    %p106 = scmp.eq.s32.totalorder %s10, 0
    %p107 = por %p105, %p106
    %p108 = scmp.ne.s32.totalorder %s100, %s102
    %p109 = scmp.eq.s32.totalorder %s15, 1
    %p110 = por %p108, %p109
    %p111 = scmp.ne.s32.totalorder %s102, %s103
    %p112 = scmp.eq.s32.totalorder %s15, 0
    %p113 = por %p111, %p112
    %p114 = scmp.ne.s32.totalorder %s102, %s103
    %p115 = scmp.eq.s32.totalorder %s16, 1
    %p116 = por %p114, %p115
    %p118 = scmp.ne.s32.totalorder %s103, %s117
    %p119 = scmp.eq.s32.totalorder %s16, 0
    %p120 = por %p118, %p119
    %s121 = ssub.s32 %s17, %s29
    %s122 = ssub.s32 %s18, %s25
    %s123 = sor.u32 %s121, %s122
    %p124 = scmp.eq.s32.totalorder %s123, 0
    %s126 = sadd.s32 %s125, 1
    %s127 = scalar_select %p124, %s125, %s126
    %p130 = pneg %p124
    %p131 = scmp.eq.s32.totalorder %s10, 1
    %p132 = por %p130, %p131
    %p133 = scmp.ne.s32.totalorder %s125, %s128
    %p134 = scmp.eq.s32.totalorder %s10, 0
    %p135 = por %p133, %p134
    %p136 = scmp.ne.s32.totalorder %s125, %s128
    %p137 = scmp.eq.s32.totalorder %s15, 1
    %p138 = por %p136, %p137
    %p139 = scmp.ne.s32.totalorder %s128, %s129
    %p140 = scmp.eq.s32.totalorder %s15, 0
    %p141 = por %p139, %p140
    %p142 = scmp.ne.s32.totalorder %s128, %s129
    %p143 = scmp.eq.s32.totalorder %s16, 1
    %p144 = por %p142, %p143
    %p146 = scmp.ne.s32.totalorder %s129, %s145
    %p147 = scmp.eq.s32.totalorder %s16, 0
    %p148 = por %p146, %p147
    %p149 = scmp.le.s32.totalorder 1, %s10
    %p150 = scmp.lt.s32.totalorder %s10, 3
    %p151 = pnand %p149, %p150
    %p152 = pneg %p151
    // Predicated region
    $region9: #{conv_bn_relu.3} parent=5 // pred_check
      _
    $region10: #{conv_bn_relu.3} parent=5 // pred_check_branch
      %154 = sbr.rel (%p151) target = $region12
    $region11: #{conv_bn_relu.3} parent=5 // pred_region
      %s155 = ssub.s32 %s10, 1
      // Predicated region
      $region13: #{conv_bn_relu.3} parent=11 // pred_check
        %p156 = pneg %p43
      $region14: #{conv_bn_relu.3} parent=11 // pred_check_branch
        %158 = sbr.rel (%p156) target = $region16
      $region15: #{conv_bn_relu.3} parent=11 // pred_region
        _
      $region16: #{conv_bn_relu.3} parent=11 // pred_fallthru
        _
      // Predicated region
      $region17: #{conv_bn_relu.3} parent=11 // pred_check
        %p159 = pneg %p92
      $region18: #{conv_bn_relu.3} parent=11 // pred_check_branch
        %161 = sbr.rel (%p159) target = $region20
      $region19: #{conv_bn_relu.3} parent=11 // pred_region
        _
      $region20: #{conv_bn_relu.3} parent=11 // pred_fallthru
        _
      // Predicated region
      $region21: #{conv_bn_relu.3} parent=11 // pred_check
        %p162 = pneg %p113
      $region22: #{conv_bn_relu.3} parent=11 // pred_check_branch
        %164 = sbr.rel (%p162) target = $region24
      $region23: #{conv_bn_relu.3} parent=11 // pred_region
        _
      $region24: #{conv_bn_relu.3} parent=11 // pred_fallthru
        _
    $region12: #{conv_bn_relu.3} parent=5 // pred_fallthru
      _
    %p165 = scmp.lt.s32.totalorder %s10, 2
    // Predicated region
    $region25: #{conv_bn_relu.3} parent=5 // pred_check
      %p166 = pneg %p165
    $region26: #{conv_bn_relu.3} parent=5 // pred_check_branch
      %168 = sbr.rel (%p166) target = $region28
    $region27: #{conv_bn_relu.3} parent=5 // pred_region
      // Predicated region
      $region29: #{conv_bn_relu.3} parent=27 // pred_check
        %p169 = pneg %p65
      $region30: #{conv_bn_relu.3} parent=27 // pred_check_branch
        %171 = sbr.rel (%p169) target = $region32
      $region31: #{conv_bn_relu.3} parent=27 // pred_region
        %s172 = smul.u32 2, %s18
        %p173 = scmp.lt.s32.totalorder %s17, 1
        %s174 = scalar_select %p173, %s17, 1
        %p175 = scmp.lt.s32.totalorder %s172, 1
        %s176 = scalar_select %p175, %s172, 1
        %s177 = smul.addr %s174, 10
        %s178 = sadd.s32 %s176, %s177
        %s179 = smul.addr %s178, 4
        %s180 = scalar_lea.vmem %s1, %s179
        %s181 = smul.u32 2, %s18
      $region32: #{conv_bn_relu.3} parent=27 // pred_fallthru
        _
    $region28: #{conv_bn_relu.3} parent=5 // pred_fallthru
      _
    %p182 = scmp.le.s32.totalorder 1, %s10
    %p183 = scmp.lt.s32.totalorder %s10, 3
    %p184 = pnand %p182, %p183
    %p185 = pneg %p184
    // Predicated region
    $region33: #{conv_bn_relu.3} parent=5 // pred_check
      _
    $region34: #{conv_bn_relu.3} parent=5 // pred_check_branch
      %187 = sbr.rel (%p184) target = $region36
    $region35: #{conv_bn_relu.3} parent=5 // pred_region
      %s188 = ssub.s32 %s10, 1
      %p189 = pneg %p43
      %p190 = pneg %p40
      %s191 = smul.u32 2, %s20
      %p192 = scmp.lt.s32.totalorder %s19, 1
      %s193 = scalar_select %p192, %s19, 1
      %p194 = scmp.lt.s32.totalorder %s191, 1
      %s195 = scalar_select %p194, %s191, 1
      %s196 = smul.addr %s193, 10
      %s197 = sadd.s32 %s195, %s196
      %s198 = smul.addr %s197, 4
      %s199 = scalar_lea.vmem %s1, %s198
      %p200 = pneg %p71
      %p201 = pneg %p68
      %p202 = pneg %p92
      %p203 = pneg %p89
      %p204 = pneg %p113
      %p205 = pneg %p110
      %p206 = pneg %p141
      %p207 = pneg %p138
      %s208 = smul.u32 2, %s20
      %p209 = scmp.lt.s32.totalorder %s19, 1
      %s210 = scalar_select %p209, %s19, 1
      %p211 = scmp.lt.s32.totalorder %s208, 1
      %s212 = scalar_select %p211, %s208, 1
      %s213 = smul.addr %s210, 2
      %s214 = sadd.s32 %s212, %s213
      %s215 = smul.addr %s214, 8
      %s216 = scalar_lea.vmem %s4, %s215
      %s217 = smul.u32 2, %s20
      %p218 = scmp.lt.s32.totalorder %s19, 1
      %s219 = scalar_select %p218, %s19, 1
      %p220 = scmp.lt.s32.totalorder %s217, 1
      %s221 = scalar_select %p220, %s217, 1
      %s222 = smul.addr %s219, 10
      %s223 = sadd.s32 %s221, %s222
      %s224 = smul.addr %s223, 4
      %s225 = scalar_lea.vmem %s1, %s224
      %s226 = smul.u32 2, %s20
      %s227 = smul.u32 2, %s20
      %p228 = scmp.lt.s32.totalorder %s19, 1
      %s229 = scalar_select %p228, %s19, 1
      %p230 = scmp.lt.s32.totalorder %s227, 1
      %s231 = scalar_select %p230, %s227, 1
      %s232 = smul.addr %s229, 2
      %s233 = sadd.s32 %s231, %s232
      %s234 = smul.addr %s233, 8
      %s235 = scalar_lea.vmem %s4, %s234
      %s236 = smul.u32 2, %s20
      %v238 = vld [vmem:[%s0] sm:$0xf]
      %v239 = vld [vmem:[%s0 + $0x4] sm:$0xf]
      %v240 = vld [vmem:[%s0 + $0x8] sm:$0xf]
      %v241 = vld [vmem:[%s0 + $0xc] sm:$0xf]
      %v242 = vld [vmem:[%s0 + $0x10] sm:$0xf]
      %v243 = vld [vmem:[%s0 + $0x14] sm:$0xf]
      %v244 = vld [vmem:[%s0 + $0x18] sm:$0xf]
      %v245 = vld [vmem:[%s0 + $0x1c] sm:$0xf]
      %v246 = vld [vmem:[%s0 + $0x20] sm:$0xf]
      %v247 = vld [vmem:[%s0 + $0x24] sm:$0xf]
      %v248 = vld [vmem:[%s0 + $0x28] sm:$0xf]
      %v249 = vld [vmem:[%s0 + $0x2c] sm:$0xf]
      %v250 = vld [vmem:[%s0 + $0x30] sm:$0xf]
      %v251 = vld [vmem:[%s0 + $0x34] sm:$0xf]
      %v252 = vld [vmem:[%s0 + $0x38] sm:$0xf]
      %v253 = vld [vmem:[%s0 + $0x3c] sm:$0xf]
      %v254 = vld [vmem:[%s225] sm:$0xff]
      %v255 = vld [vmem:[%s225 + $0x8] sm:$0xff]
      %v256 = vld [vmem:[%s225 + $0x10] sm:$0xff]
      %v257 = vld [vmem:[%s225 + $0x18] sm:$0xff]
      %v258 = vld [vmem:[%s225 + $0x20] sm:$0x33]
      %v275 = vunpack.c.l.b16 %v238
      %v276 = vunpack.c.l.b16 %v239
      %v277 = vunpack.c.l.b16 %v240
      %v278 = vunpack.c.l.b16 %v241
      %v279 = vunpack.c.l.b16 %v242
      %v280 = vunpack.c.l.b16 %v243
      %v281 = vunpack.c.l.b16 %v244
      %v282 = vunpack.c.l.b16 %v245
      %v283 = vunpack.c.l.b16 %v246
      %v284 = vunpack.c.l.b16 %v247
      %v285 = vunpack.c.l.b16 %v248
      %v286 = vunpack.c.l.b16 %v249
      %v287 = vunpack.c.l.b16 %v250
      %v288 = vunpack.c.l.b16 %v251
      %v289 = vunpack.c.l.b16 %v252
      %v290 = vunpack.c.l.b16 %v253
      %v291 = vpack.c.b16 %v276, %v275
      %v292 = vpack.c.b16 %v278, %v277
      %v293 = vpack.c.b16 %v280, %v279
      %v294 = vpack.c.b16 %v282, %v281
      %v295 = vpack.c.b16 %v284, %v283
      %v296 = vpack.c.b16 %v286, %v285
      %v297 = vpack.c.b16 %v288, %v287
      %v298 = vpack.c.b16 %v290, %v289
      %v304 = vunpack.c.l.b16 %v254
      %v305 = vunpack.c.h.b16 %v254
      %v306 = vunpack.c.l.b16 %v255
      %v307 = vunpack.c.h.b16 %v255
      %v308 = vunpack.c.l.b16 %v256
      %v309 = vunpack.c.h.b16 %v256
      %v310 = vunpack.c.l.b16 %v257
      %v311 = vunpack.c.h.b16 %v257
      %v312 = vunpack.c.l.b16 %v258
      %v313 = vunpack.c.h.b16 %v258
      %v314 = vpack.c.b16 %v306, %v304
      %v315 = vpack.c.b16 %v307, %v305
      %v316 = vpack.c.b16 %v310, %v308
      %v317 = vpack.c.b16 %v311, %v309
      %v318 = vpack.c.b16 %v312, %v312
      %v319 = vpack.c.b16 %v313, %v313
      %vm324 = vcmask 293888
      %v326 = vsel %vm324, %v291, 0
      %v329 = vsel %vm324, %v292, 0
      %v332 = vsel %vm324, %v293, 0
      %v335 = vsel %vm324, %v294, 0
      %v338 = vsel %vm324, %v295, 0
      %v341 = vsel %vm324, %v296, 0
      %v344 = vsel %vm324, %v297, 0
      %v347 = vsel %vm324, %v298, 0
      %vm349 = vcmask 1041408
      %v351 = vsel %vm349, %v318, 0
      %v354 = vsel %vm349, %v319, 0
      %356 = vmatprep.subr.bf16.mxu0 %v315
      %357 = vmatpush1.bf16.msra.mxu0 %v314
      %358 = vmatprep.subr.bf16.mxu0 %v317
      %359 = vmatpush1.bf16.msra.mxu0 %v316
      %360 = vmatprep.subr.bf16.mxu0 %v354
      %361 = vmatpush1.bf16.msra.mxu0 %v351
      %362 = vmatprep.subr.bf16.mxu0 0
      %363 = vmatpush1.bf16.msra.mxu0 0
      %364 = vmatprep.subr.bf16.mxu0 0
      %365 = vmatpush1.bf16.msra.mxu0 0
      %366 = vmatprep.subr.bf16.mxu0 0
      %367 = vmatpush1.bf16.msra.mxu0 0
      %368 = vmatprep.subr.bf16.mxu0 0
      %369 = vmatpush1.bf16.msra.mxu0 0
      %370 = vmatprep.subr.bf16.mxu0 0
      %371 = vmatpush1.bf16.msra.mxu0 0
      %372 = vmatprep.subr.bf16.mxu0 0
      %373 = vmatpush1.bf16.msra.mxu0 0
      %374 = vmatprep.subr.bf16.mxu0 0
      %375 = vmatpush1.bf16.msra.mxu0 0
      %376 = vmatprep.subr.bf16.mxu0 0
      %377 = vmatpush1.bf16.msra.mxu0 0
      %378 = vmatprep.subr.bf16.mxu0 0
      %379 = vmatpush1.bf16.msra.mxu0 0
      %380 = vmatprep.subr.bf16.mxu0 0
      %381 = vmatpush1.bf16.msra.mxu0 0
      %382 = vmatprep.subr.bf16.mxu0 0
      %383 = vmatpush1.bf16.msra.mxu0 0
      %384 = vmatprep.subr.bf16.mxu0 0
      %385 = vmatpush1.bf16.msra.mxu0 0
      %386 = vmatprep.subr.bf16.mxu0 0
      %387 = vmatpush1.bf16.msra.mxu0 0
      %388 = vmatprep.mubr.bf16.mxu0 0
      %389 = vmatmul.mubr.bf16.gmra.mrb[0].mxu0 %v326
      %v390 = vpop.f32.mrb[0].mxu0
      %v391 = vadd.f32 0.0, %v390
      %v392 = vpop.f32.mrb[0].mxu0
      %v393 = vadd.f32 0.0, %v392
      %v394 = vpop.f32.mrb[0].mxu0
      %v395 = vpop.f32.mrb[0].mxu0
      %396 = vmatprep.mubr.bf16.mxu0 0
      %397 = vmatmul.mubr.bf16.gmra.mrb[0].mxu0 %v329
      %v398 = vpop.f32.mrb[0].mxu0
      %v399 = vpop.f32.mrb[0].mxu0
      %v400 = vpop.f32.mrb[0].mxu0
      %v401 = vpop.f32.mrb[0].mxu0
      %402 = vmatprep.mubr.bf16.mxu0 0
      %403 = vmatmul.mubr.bf16.gmra.mrb[0].mxu0 %v332
      %v404 = vpop.f32.mrb[0].mxu0
      %v405 = vpop.f32.mrb[0].mxu0
      %v406 = vpop.f32.mrb[0].mxu0
      %v407 = vpop.f32.mrb[0].mxu0
      %408 = vmatprep.mubr.bf16.mxu0 0
      %409 = vmatmul.mubr.bf16.gmra.mrb[0].mxu0 %v335
      %v410 = vpop.f32.mrb[0].mxu0
      %v411 = vpop.f32.mrb[0].mxu0
      %v412 = vpop.f32.mrb[0].mxu0
      %v413 = vpop.f32.mrb[0].mxu0
      %414 = vmatprep.mubr.bf16.mxu0 0
      %415 = vmatmul.mubr.bf16.gmra.mrb[0].mxu0 %v338
      %v416 = vpop.f32.mrb[0].mxu0
      %v417 = vpop.f32.mrb[0].mxu0
      %v418 = vpop.f32.mrb[0].mxu0
      %v419 = vpop.f32.mrb[0].mxu0
      %420 = vmatprep.mubr.bf16.mxu0 0
      %421 = vmatmul.mubr.bf16.gmra.mrb[0].mxu0 %v341
      %v422 = vpop.f32.mrb[0].mxu0
      %v423 = vpop.f32.mrb[0].mxu0
      %v424 = vpop.f32.mrb[0].mxu0
      %v425 = vpop.f32.mrb[0].mxu0
      %426 = vmatprep.mubr.bf16.mxu0 0
      %427 = vmatmul.mubr.bf16.gmra.mrb[0].mxu0 %v344
      %v428 = vpop.f32.mrb[0].mxu0
      %v429 = vpop.f32.mrb[0].mxu0
      %v430 = vpop.f32.mrb[0].mxu0
      %v431 = vpop.f32.mrb[0].mxu0
      %432 = vmatprep.mubr.bf16.mxu0 0
      %433 = vmatmul.mubr.bf16.gmra.mrb[0].mxu0 %v347
      %v434 = vpop.f32.mrb[0].mxu0
      %v435 = vpop.f32.mrb[0].mxu0
      %v436 = vpop.f32.mrb[0].mxu0
      %v437 = vpop.f32.mrb[0].mxu0
      %438 = vdwg.mxu0
      %v439 = vld [vmem:[%s2] sm:$0xff]
      %441 = vset.pattern.permute.xlu0 0
      %442 = vperm.xlu0 %441, %v439
      %v443 = vpop.permute.xlu0 %442
      %v445 = vmul.f32 %v391, %v443
      %v446 = vmul.f32 %v393, %v443
      %v447 = vld [vmem:[%s3] sm:$0xff]
      %449 = vset.pattern.permute.xlu0 0
      %450 = vperm.xlu0 %449, %v447
      %v451 = vpop.permute.xlu0 %450
      %v453 = vadd.f32 %v445, %v451
      %v454 = vadd.f32 %v446, %v451
      %v455 = vmax.f32 %v453, 0.0
      %v456 = vmax.f32 %v454, 0.0
      %457 = vst [vmem:[%s235] sm:$0xff] %v455
      %458 = vst [vmem:[%s235 + $0x8] sm:$0xff] %v456
      %s459 = smul.u32 2, %s20
      %p460 = scmp.lt.s32.totalorder %s19, 1
      %s461 = scalar_select %p460, %s19, 1
      %p462 = scmp.lt.s32.totalorder %s459, 1
      %s463 = scalar_select %p462, %s459, 1
      %s464 = smul.addr %s461, 2
      %s465 = sadd.s32 %s463, %s464
      %s466 = smul.addr %s465, 8
      %s467 = scalar_lea.vmem %s4, %s466
      // Predicated region
      $region37: #{conv_bn_relu.3} parent=35 // pred_check
        %p468 = pneg %p138
      $region38: #{conv_bn_relu.3} parent=35 // pred_check_branch
        %470 = sbr.rel (%p468) target = $region40
      $region39: #{conv_bn_relu.3} parent=35 // pred_region
        %s471 = smul.u32 2, %s20
      $region40: #{conv_bn_relu.3} parent=35 // pred_fallthru
        _
    $region36: #{conv_bn_relu.3} parent=5 // pred_fallthru
      _
    %p472 = scmp.le.s32.totalorder 2, %s10
    // Predicated region
    $region41: #{conv_bn_relu.3} parent=5 // pred_check
      %p473 = pneg %p472
    $region42: #{conv_bn_relu.3} parent=5 // pred_check_branch
      %475 = sbr.rel (%p473) target = $region44
    $region43: #{conv_bn_relu.3} parent=5 // pred_region
      %s476 = ssub.s32 %s10, 2
      // Predicated region
      $region45: #{conv_bn_relu.3} parent=43 // pred_check
        %p477 = pneg %p144
      $region46: #{conv_bn_relu.3} parent=43 // pred_check_branch
        %479 = sbr.rel (%p477) target = $region48
      $region47: #{conv_bn_relu.3} parent=43 // pred_region
        %s480 = smul.u32 2, %s22
        %p481 = scmp.lt.s32.totalorder %s21, 1
        %s482 = scalar_select %p481, %s21, 1
        %p483 = scmp.lt.s32.totalorder %s480, 1
        %s484 = scalar_select %p483, %s480, 1
        %s485 = smul.addr %s482, 2
        %s486 = sadd.s32 %s484, %s485
        %s487 = smul.addr %s486, 8
        %s488 = scalar_lea.vmem %s4, %s487
      $region48: #{conv_bn_relu.3} parent=43 // pred_fallthru
        _
    $region44: #{conv_bn_relu.3} parent=5 // pred_fallthru
      _
  $region6: #{conv_bn_relu.3} parent=0 // loop_footer
    %s14 = sadd.s32 1, %s10
  $region7: #{conv_bn_relu.3} parent=0 // loop_footer_branch
    %9 = sbr.rel target = $region3
  $region8: #{conv_bn_relu.3} parent=0 // loop_exit
    _

// kernel: conv_bn_relu.2
$region0: #{conv_bn_relu.2}
  #allocation0 [shape = 'u32[]', space=smem, size = 0x4, offset = 0x4, fixed_abs, tag = 'smem constant byte address 0x4 - core index']
  #allocation1 [shape = 'u32[144,128]{1,0:T(1,128)}', space=vmem, size = 0x12000, scoped, tag = 'internal scratch']
  %s0 = inlined_call_operand.vmem [shape: bf16[128,36], index: 0, kind: input, shape index: {}]
  %s1 = inlined_call_operand.vmem [shape: bf16[2,36,256], index: 1, kind: input, shape index: {}]
  %s2 = inlined_call_operand.vmem [shape: f32[2,1,128,1], index: 2, kind: output, shape index: {0}]
  %s3 = inlined_call_operand.vmem [shape: f32[2,1,128,1], index: 3, kind: output, shape index: {1}]
  %4 = xla_tuple %s2, %s3
  %s5 = sld [smem:[#allocation0]]
  $region49: #{conv_bn_relu.2} parent=0
    _
  %s7 = ssub.s32 1, %s5
  %s8 = scalar_select 0, %s7, %s5
  loop: start=0, step=1, limit=4
  $region2: #{conv_bn_relu.2} parent=0 // loop_pre_header
    _
  $region3: #{conv_bn_relu.2} parent=0 // loop_header
    %s10 = sphi 0, %s14
    %p11 = scmp.ge.s32.totalorder %s10, 4
    %s17 = sphi 0, %s29
    %s18 = sphi 0, %s25
    %s19 = sphi 0, %s17
    %s20 = sphi 0, %s18
    %s21 = sphi 0, %s19
    %s22 = sphi 0, %s20
    %s30 = sphi 0, %s30
    %s32 = sphi 0, %s30
    %s33 = sphi 0, %s32
    %s47 = sphi 0, %s33
    %s55 = sphi 0, %s57
    %s58 = sphi 0, %s55
    %s59 = sphi 0, %s58
    %s75 = sphi 0, %s59
    %s83 = sphi 0, %s85
    %s86 = sphi 0, %s83
    %s87 = sphi 0, %s86
    %s103 = sphi 0, %s87
    %s111 = sphi 0, %s113
    %s114 = sphi 0, %s111
    %s115 = sphi 0, %s114
    %s131 = sphi 0, %s115
  $region4: #{conv_bn_relu.2} parent=0 // loop_header_branch
    %13 = sbr.rel (%p11) target = $region8
  $region5: #{conv_bn_relu.2} parent=0 // loop_body
    %s15 = ssub.s32 %s10, 1
    %s16 = ssub.s32 %s10, 2
    %s23 = sadd.s32 1, %s18
    %p24 = scmp.ge.s32.totalorder %s23, 1
    %s25 = scalar_select %p24, 0, %s23
    %s26 = sadd.s32 1, %s17
    %s27 = scalar_select %p24, %s26, %s17
    %p28 = scmp.ge.s32.totalorder %s27, 2
    %s29 = scalar_select %p28, 0, %s27
    %s31 = sadd.s32 %s30, 1
    %p34 = scmp.eq.s32.totalorder %s10, 1
    %p35 = scmp.ne.s32.totalorder %s30, %s32
    %p36 = scmp.eq.s32.totalorder %s10, 0
    %p37 = por %p35, %p36
    %p38 = scmp.ne.s32.totalorder %s30, %s32
    %p39 = scmp.eq.s32.totalorder %s15, 1
    %p40 = por %p38, %p39
    %p41 = scmp.ne.s32.totalorder %s32, %s33
    %p42 = scmp.eq.s32.totalorder %s15, 0
    %p43 = por %p41, %p42
    %p44 = scmp.ne.s32.totalorder %s32, %s33
    %p45 = scmp.eq.s32.totalorder %s16, 1
    %p46 = por %p44, %p45
    %p48 = scmp.ne.s32.totalorder %s33, %s47
    %p49 = scmp.eq.s32.totalorder %s16, 0
    %p50 = por %p48, %p49
    %s51 = ssub.s32 %s17, %s29
    %s52 = ssub.s32 %s18, %s25
    %s53 = sor.u32 %s51, %s52
    %p54 = scmp.eq.s32.totalorder %s53, 0
    %s56 = sadd.s32 %s55, 1
    %s57 = scalar_select %p54, %s55, %s56
    %p60 = pneg %p54
    %p61 = scmp.eq.s32.totalorder %s10, 1
    %p62 = por %p60, %p61
    %p63 = scmp.ne.s32.totalorder %s55, %s58
    %p64 = scmp.eq.s32.totalorder %s10, 0
    %p65 = por %p63, %p64
    %p66 = scmp.ne.s32.totalorder %s55, %s58
    %p67 = scmp.eq.s32.totalorder %s15, 1
    %p68 = por %p66, %p67
    %p69 = scmp.ne.s32.totalorder %s58, %s59
    %p70 = scmp.eq.s32.totalorder %s15, 0
    %p71 = por %p69, %p70
    %p72 = scmp.ne.s32.totalorder %s58, %s59
    %p73 = scmp.eq.s32.totalorder %s16, 1
    %p74 = por %p72, %p73
    %p76 = scmp.ne.s32.totalorder %s59, %s75
    %p77 = scmp.eq.s32.totalorder %s16, 0
    %p78 = por %p76, %p77
    %s79 = ssub.s32 %s17, %s29
    %s80 = ssub.s32 %s18, %s25
    %s81 = sor.u32 %s79, %s80
    %p82 = scmp.eq.s32.totalorder %s81, 0
    %s84 = sadd.s32 %s83, 1
    %s85 = scalar_select %p82, %s83, %s84
    %p88 = pneg %p82
    %p89 = scmp.eq.s32.totalorder %s10, 1
    %p90 = por %p88, %p89
    %p91 = scmp.ne.s32.totalorder %s83, %s86
    %p92 = scmp.eq.s32.totalorder %s10, 0
    %p93 = por %p91, %p92
    %p94 = scmp.ne.s32.totalorder %s83, %s86
    %p95 = scmp.eq.s32.totalorder %s15, 1
    %p96 = por %p94, %p95
    %p97 = scmp.ne.s32.totalorder %s86, %s87
    %p98 = scmp.eq.s32.totalorder %s15, 0
    %p99 = por %p97, %p98
    %p100 = scmp.ne.s32.totalorder %s86, %s87
    %p101 = scmp.eq.s32.totalorder %s16, 1
    %p102 = por %p100, %p101
    %p104 = scmp.ne.s32.totalorder %s87, %s103
    %p105 = scmp.eq.s32.totalorder %s16, 0
    %p106 = por %p104, %p105
    %s107 = ssub.s32 %s17, %s29
    %s108 = ssub.s32 %s18, %s25
    %s109 = sor.u32 %s107, %s108
    %p110 = scmp.eq.s32.totalorder %s109, 0
    %s112 = sadd.s32 %s111, 1
    %s113 = scalar_select %p110, %s111, %s112
    %p116 = pneg %p110
    %p117 = scmp.eq.s32.totalorder %s10, 1
    %p118 = por %p116, %p117
    %p119 = scmp.ne.s32.totalorder %s111, %s114
    %p120 = scmp.eq.s32.totalorder %s10, 0
    %p121 = por %p119, %p120
    %p122 = scmp.ne.s32.totalorder %s111, %s114
    %p123 = scmp.eq.s32.totalorder %s15, 1
    %p124 = por %p122, %p123
    %p125 = scmp.ne.s32.totalorder %s114, %s115
    %p126 = scmp.eq.s32.totalorder %s15, 0
    %p127 = por %p125, %p126
    %p128 = scmp.ne.s32.totalorder %s114, %s115
    %p129 = scmp.eq.s32.totalorder %s16, 1
    %p130 = por %p128, %p129
    %p132 = scmp.ne.s32.totalorder %s115, %s131
    %p133 = scmp.eq.s32.totalorder %s16, 0
    %p134 = por %p132, %p133
    %p135 = scmp.le.s32.totalorder 1, %s10
    %p136 = scmp.lt.s32.totalorder %s10, 3
    %p137 = pnand %p135, %p136
    %p138 = pneg %p137
    // Predicated region
    $region9: #{conv_bn_relu.2} parent=5 // pred_check
      _
    $region10: #{conv_bn_relu.2} parent=5 // pred_check_branch
      %140 = sbr.rel (%p137) target = $region12
    $region11: #{conv_bn_relu.2} parent=5 // pred_region
      %s141 = ssub.s32 %s10, 1
      // Predicated region
      $region13: #{conv_bn_relu.2} parent=11 // pred_check
        %p142 = pneg %p43
      $region14: #{conv_bn_relu.2} parent=11 // pred_check_branch
        %144 = sbr.rel (%p142) target = $region16
      $region15: #{conv_bn_relu.2} parent=11 // pred_region
        _
      $region16: #{conv_bn_relu.2} parent=11 // pred_fallthru
        _
    $region12: #{conv_bn_relu.2} parent=5 // pred_fallthru
      _
    %p145 = scmp.lt.s32.totalorder %s10, 2
    // Predicated region
    $region17: #{conv_bn_relu.2} parent=5 // pred_check
      %p146 = pneg %p145
    $region18: #{conv_bn_relu.2} parent=5 // pred_check_branch
      %148 = sbr.rel (%p146) target = $region20
    $region19: #{conv_bn_relu.2} parent=5 // pred_region
      // Predicated region
      $region21: #{conv_bn_relu.2} parent=19 // pred_check
        %p149 = pneg %p65
      $region22: #{conv_bn_relu.2} parent=19 // pred_check_branch
        %151 = sbr.rel (%p149) target = $region24
      $region23: #{conv_bn_relu.2} parent=19 // pred_region
        %s152 = smul.u32 2, %s18
        %p153 = scmp.lt.s32.totalorder %s17, 1
        %s154 = scalar_select %p153, %s17, 1
        %p155 = scmp.lt.s32.totalorder %s152, 1
        %s156 = scalar_select %p155, %s152, 1
        %s157 = smul.addr %s154, 10
        %s158 = sadd.s32 %s156, %s157
        %s159 = smul.addr %s158, 4
        %s160 = scalar_lea.vmem %s1, %s159
        %s161 = smul.u32 2, %s18
      $region24: #{conv_bn_relu.2} parent=19 // pred_fallthru
        _
    $region20: #{conv_bn_relu.2} parent=5 // pred_fallthru
      _
    %p162 = scmp.le.s32.totalorder 1, %s10
    %p163 = scmp.lt.s32.totalorder %s10, 3
    %p164 = pnand %p162, %p163
    %p165 = pneg %p164
    // Predicated region
    $region25: #{conv_bn_relu.2} parent=5 // pred_check
      _
    $region26: #{conv_bn_relu.2} parent=5 // pred_check_branch
      %167 = sbr.rel (%p164) target = $region28
    $region27: #{conv_bn_relu.2} parent=5 // pred_region
      %s168 = ssub.s32 %s10, 1
      %p169 = pneg %p43
      %p170 = pneg %p40
      %s171 = smul.u32 2, %s20
      %p172 = scmp.lt.s32.totalorder %s19, 1
      %s173 = scalar_select %p172, %s19, 1
      %p174 = scmp.lt.s32.totalorder %s171, 1
      %s175 = scalar_select %p174, %s171, 1
      %s176 = smul.addr %s173, 10
      %s177 = sadd.s32 %s175, %s176
      %s178 = smul.addr %s177, 4
      %s179 = scalar_lea.vmem %s1, %s178
      %p180 = pneg %p71
      %p181 = pneg %p68
      %p182 = pneg %p99
      %p183 = pneg %p96
      %p184 = scmp.lt.s32.totalorder %s19, 1
      %s185 = scalar_select %p184, %s19, 1
      %p186 = scmp.lt.s32.totalorder %s20, 0
      %s187 = scalar_select %p186, %s20, 0
      %s188 = smul.addr %s187, 16
      %s189 = smul.addr %s185, 16
      %s190 = sadd.s32 %s188, %s189
      %s191 = smul.addr %s190, 8
      %s192 = scalar_lea.vmem %s2, %s191
      %p193 = pneg %p127
      %p194 = pneg %p124
      %p195 = scmp.lt.s32.totalorder %s19, 1
      %s196 = scalar_select %p195, %s19, 1
      %p197 = scmp.lt.s32.totalorder %s20, 0
      %s198 = scalar_select %p197, %s20, 0
      %s199 = smul.addr %s198, 16
      %s200 = smul.addr %s196, 16
      %s201 = sadd.s32 %s199, %s200
      %s202 = smul.addr %s201, 8
      %s203 = scalar_lea.vmem %s3, %s202
      %s204 = smul.u32 2, %s20
      %p205 = scmp.lt.s32.totalorder %s19, 1
      %s206 = scalar_select %p205, %s19, 1
      %p207 = scmp.lt.s32.totalorder %s204, 1
      %s208 = scalar_select %p207, %s204, 1
      %s209 = smul.addr %s206, 10
      %s210 = sadd.s32 %s208, %s209
      %s211 = smul.addr %s210, 4
      %s212 = scalar_lea.vmem %s1, %s211
      %s213 = smul.u32 2, %s20
      %p214 = scmp.lt.s32.totalorder %s19, 1
      %s215 = scalar_select %p214, %s19, 1
      %p216 = scmp.lt.s32.totalorder %s20, 0
      %s217 = scalar_select %p216, %s20, 0
      %s218 = smul.addr %s217, 16
      %s219 = smul.addr %s215, 16
      %s220 = sadd.s32 %s218, %s219
      %s221 = smul.addr %s220, 8
      %s222 = scalar_lea.vmem %s2, %s221
      %p223 = scmp.lt.s32.totalorder %s19, 1
      %s224 = scalar_select %p223, %s19, 1
      %p225 = scmp.lt.s32.totalorder %s20, 0
      %s226 = scalar_select %p225, %s20, 0
      %s227 = smul.addr %s226, 16
      %s228 = smul.addr %s224, 16
      %s229 = sadd.s32 %s227, %s228
      %s230 = smul.addr %s229, 8
      %s231 = scalar_lea.vmem %s3, %s230
      %v233 = vld [vmem:[%s0] sm:$0xf]
      %v234 = vld [vmem:[%s0 + $0x4] sm:$0xf]
      %v235 = vld [vmem:[%s0 + $0x8] sm:$0xf]
      %v236 = vld [vmem:[%s0 + $0xc] sm:$0xf]
      %v237 = vld [vmem:[%s0 + $0x10] sm:$0xf]
      %v238 = vld [vmem:[%s0 + $0x14] sm:$0xf]
      %v239 = vld [vmem:[%s0 + $0x18] sm:$0xf]
      %v240 = vld [vmem:[%s0 + $0x1c] sm:$0xf]
      %v241 = vld [vmem:[%s0 + $0x20] sm:$0xf]
      %v242 = vld [vmem:[%s0 + $0x24] sm:$0xf]
      %v243 = vld [vmem:[%s0 + $0x28] sm:$0xf]
      %v244 = vld [vmem:[%s0 + $0x2c] sm:$0xf]
      %v245 = vld [vmem:[%s0 + $0x30] sm:$0xf]
      %v246 = vld [vmem:[%s0 + $0x34] sm:$0xf]
      %v247 = vld [vmem:[%s0 + $0x38] sm:$0xf]
      %v248 = vld [vmem:[%s0 + $0x3c] sm:$0xf]
      %v249 = vld [vmem:[%s212] sm:$0xff]
      %v250 = vld [vmem:[%s212 + $0x8] sm:$0xff]
      %v251 = vld [vmem:[%s212 + $0x10] sm:$0xff]
      %v252 = vld [vmem:[%s212 + $0x18] sm:$0xff]
      %v253 = vld [vmem:[%s212 + $0x20] sm:$0x33]
      %v270 = vunpack.c.l.b16 %v233
      %v271 = vunpack.c.l.b16 %v234
      %v272 = vunpack.c.l.b16 %v235
      %v273 = vunpack.c.l.b16 %v236
      %v274 = vunpack.c.l.b16 %v237
      %v275 = vunpack.c.l.b16 %v238
      %v276 = vunpack.c.l.b16 %v239
      %v277 = vunpack.c.l.b16 %v240
      %v278 = vunpack.c.l.b16 %v241
      %v279 = vunpack.c.l.b16 %v242
      %v280 = vunpack.c.l.b16 %v243
      %v281 = vunpack.c.l.b16 %v244
      %v282 = vunpack.c.l.b16 %v245
      %v283 = vunpack.c.l.b16 %v246
      %v284 = vunpack.c.l.b16 %v247
      %v285 = vunpack.c.l.b16 %v248
      %v286 = vpack.c.b16 %v271, %v270
      %v287 = vpack.c.b16 %v273, %v272
      %v288 = vpack.c.b16 %v275, %v274
      %v289 = vpack.c.b16 %v277, %v276
      %v290 = vpack.c.b16 %v279, %v278
      %v291 = vpack.c.b16 %v281, %v280
      %v292 = vpack.c.b16 %v283, %v282
      %v293 = vpack.c.b16 %v285, %v284
      %v299 = vunpack.c.l.b16 %v249
      %v300 = vunpack.c.h.b16 %v249
      %v301 = vunpack.c.l.b16 %v250
      %v302 = vunpack.c.h.b16 %v250
      %v303 = vunpack.c.l.b16 %v251
      %v304 = vunpack.c.h.b16 %v251
      %v305 = vunpack.c.l.b16 %v252
      %v306 = vunpack.c.h.b16 %v252
      %v307 = vunpack.c.l.b16 %v253
      %v308 = vunpack.c.h.b16 %v253
      %v309 = vpack.c.b16 %v301, %v299
      %v310 = vpack.c.b16 %v302, %v300
      %v311 = vpack.c.b16 %v305, %v303
      %v312 = vpack.c.b16 %v306, %v304
      %v313 = vpack.c.b16 %v307, %v307
      %v314 = vpack.c.b16 %v308, %v308
      %vm319 = vcmask 293888
      %v321 = vsel %vm319, %v286, 0
      %v324 = vsel %vm319, %v287, 0
      %v327 = vsel %vm319, %v288, 0
      %v330 = vsel %vm319, %v289, 0
      %v333 = vsel %vm319, %v290, 0
      %v336 = vsel %vm319, %v291, 0
      %v339 = vsel %vm319, %v292, 0
      %v342 = vsel %vm319, %v293, 0
      %vm344 = vcmask 1041408
      %v346 = vsel %vm344, %v313, 0
      %v349 = vsel %vm344, %v314, 0
      %351 = vmatprep.subr.bf16.mxu0 %v310
      %352 = vmatpush1.bf16.msra.mxu0 %v309
      %353 = vmatprep.subr.bf16.mxu0 %v312
      %354 = vmatpush1.bf16.msra.mxu0 %v311
      %355 = vmatprep.subr.bf16.mxu0 %v349
      %356 = vmatpush1.bf16.msra.mxu0 %v346
      %357 = vmatprep.subr.bf16.mxu0 0
      %358 = vmatpush1.bf16.msra.mxu0 0
      %359 = vmatprep.subr.bf16.mxu0 0
      %360 = vmatpush1.bf16.msra.mxu0 0
      %361 = vmatprep.subr.bf16.mxu0 0
      %362 = vmatpush1.bf16.msra.mxu0 0
      %363 = vmatprep.subr.bf16.mxu0 0
      %364 = vmatpush1.bf16.msra.mxu0 0
      %365 = vmatprep.subr.bf16.mxu0 0
      %366 = vmatpush1.bf16.msra.mxu0 0
      %367 = vmatprep.subr.bf16.mxu0 0
      %368 = vmatpush1.bf16.msra.mxu0 0
      %369 = vmatprep.subr.bf16.mxu0 0
      %370 = vmatpush1.bf16.msra.mxu0 0
      %371 = vmatprep.subr.bf16.mxu0 0
      %372 = vmatpush1.bf16.msra.mxu0 0
      %373 = vmatprep.subr.bf16.mxu0 0
      %374 = vmatpush1.bf16.msra.mxu0 0
      %375 = vmatprep.subr.bf16.mxu0 0
      %376 = vmatpush1.bf16.msra.mxu0 0
      %377 = vmatprep.subr.bf16.mxu0 0
      %378 = vmatpush1.bf16.msra.mxu0 0
      %379 = vmatprep.subr.bf16.mxu0 0
      %380 = vmatpush1.bf16.msra.mxu0 0
      %381 = vmatprep.subr.bf16.mxu0 0
      %382 = vmatpush1.bf16.msra.mxu0 0
      %383 = vmatprep.mubr.bf16.mxu0 0
      %384 = vmatmul.mubr.bf16.gmra.mrb[0].mxu0 %v321
      %v385 = vpop.f32.mrb[0].mxu0
      %v386 = vadd.f32 0.0, %v385
      %v387 = vpop.f32.mrb[0].mxu0
      %v388 = vadd.f32 0.0, %v387
      %v389 = vpop.f32.mrb[0].mxu0
      %v390 = vadd.f32 0.0, %v389
      %v391 = vpop.f32.mrb[0].mxu0
      %v392 = vadd.f32 0.0, %v391
      %393 = vmatprep.mubr.bf16.mxu0 0
      %394 = vmatmul.mubr.bf16.gmra.mrb[0].mxu0 %v324
      %v395 = vpop.f32.mrb[0].mxu0
      %v396 = vadd.f32 0.0, %v395
      %v397 = vpop.f32.mrb[0].mxu0
      %v398 = vadd.f32 0.0, %v397
      %v399 = vpop.f32.mrb[0].mxu0
      %v400 = vadd.f32 0.0, %v399
      %v401 = vpop.f32.mrb[0].mxu0
      %v402 = vadd.f32 0.0, %v401
      %403 = vmatprep.mubr.bf16.mxu0 0
      %404 = vmatmul.mubr.bf16.gmra.mrb[0].mxu0 %v327
      %v405 = vpop.f32.mrb[0].mxu0
      %v406 = vadd.f32 0.0, %v405
      %v407 = vpop.f32.mrb[0].mxu0
      %v408 = vadd.f32 0.0, %v407
      %v409 = vpop.f32.mrb[0].mxu0
      %v410 = vadd.f32 0.0, %v409
      %v411 = vpop.f32.mrb[0].mxu0
      %v412 = vadd.f32 0.0, %v411
      %413 = vmatprep.mubr.bf16.mxu0 0
      %414 = vmatmul.mubr.bf16.gmra.mrb[0].mxu0 %v330
      %v415 = vpop.f32.mrb[0].mxu0
      %v416 = vadd.f32 0.0, %v415
      %v417 = vpop.f32.mrb[0].mxu0
      %v418 = vadd.f32 0.0, %v417
      %v419 = vpop.f32.mrb[0].mxu0
      %v420 = vadd.f32 0.0, %v419
      %v421 = vpop.f32.mrb[0].mxu0
      %v422 = vadd.f32 0.0, %v421
      %423 = vmatprep.mubr.bf16.mxu0 0
      %424 = vmatmul.mubr.bf16.gmra.mrb[0].mxu0 %v333
      %v425 = vpop.f32.mrb[0].mxu0
      %v426 = vadd.f32 0.0, %v425
      %v427 = vpop.f32.mrb[0].mxu0
      %v428 = vadd.f32 0.0, %v427
      %v429 = vpop.f32.mrb[0].mxu0
      %v430 = vadd.f32 0.0, %v429
      %v431 = vpop.f32.mrb[0].mxu0
      %v432 = vadd.f32 0.0, %v431
      %433 = vmatprep.mubr.bf16.mxu0 0
      %434 = vmatmul.mubr.bf16.gmra.mrb[0].mxu0 %v336
      %v435 = vpop.f32.mrb[0].mxu0
      %v436 = vadd.f32 0.0, %v435
      %v437 = vpop.f32.mrb[0].mxu0
      %v438 = vadd.f32 0.0, %v437
      %v439 = vpop.f32.mrb[0].mxu0
      %v440 = vadd.f32 0.0, %v439
      %v441 = vpop.f32.mrb[0].mxu0
      %v442 = vadd.f32 0.0, %v441
      %443 = vmatprep.mubr.bf16.mxu0 0
      %444 = vmatmul.mubr.bf16.gmra.mrb[0].mxu0 %v339
      %v445 = vpop.f32.mrb[0].mxu0
      %v446 = vadd.f32 0.0, %v445
      %v447 = vpop.f32.mrb[0].mxu0
      %v448 = vadd.f32 0.0, %v447
      %v449 = vpop.f32.mrb[0].mxu0
      %v450 = vadd.f32 0.0, %v449
      %v451 = vpop.f32.mrb[0].mxu0
      %v452 = vadd.f32 0.0, %v451
      %453 = vmatprep.mubr.bf16.mxu0 0
      %454 = vmatmul.mubr.bf16.gmra.mrb[0].mxu0 %v342
      %v455 = vpop.f32.mrb[0].mxu0
      %v456 = vadd.f32 0.0, %v455
      %v457 = vpop.f32.mrb[0].mxu0
      %v458 = vadd.f32 0.0, %v457
      %v459 = vpop.f32.mrb[0].mxu0
      %v460 = vadd.f32 0.0, %v459
      %v461 = vpop.f32.mrb[0].mxu0
      %v462 = vadd.f32 0.0, %v461
      %463 = vdwg.mxu0
      %v464 = vadd.f32 %v386, %v388
      %465 = vadd.xlane.f32.xlu0 %v464
      %v466 = vpop.xlane.xlu0 %465
      %v467 = vadd.f32 %v390, %v392
      %468 = vadd.xlane.f32.xlu0 %v467
      %v469 = vpop.xlane.xlu0 %468
      %v470 = vadd.f32 %v396, %v398
      %471 = vadd.xlane.f32.xlu0 %v470
      %v472 = vpop.xlane.xlu0 %471
      %v473 = vadd.f32 %v400, %v402
      %474 = vadd.xlane.f32.xlu0 %v473
      %v475 = vpop.xlane.xlu0 %474
      %v476 = vadd.f32 %v406, %v408
      %477 = vadd.xlane.f32.xlu0 %v476
      %v478 = vpop.xlane.xlu0 %477
      %v479 = vadd.f32 %v410, %v412
      %480 = vadd.xlane.f32.xlu0 %v479
      %v481 = vpop.xlane.xlu0 %480
      %v482 = vadd.f32 %v416, %v418
      %483 = vadd.xlane.f32.xlu0 %v482
      %v484 = vpop.xlane.xlu0 %483
      %v485 = vadd.f32 %v420, %v422
      %486 = vadd.xlane.f32.xlu0 %v485
      %v487 = vpop.xlane.xlu0 %486
      %v488 = vadd.f32 %v426, %v428
      %489 = vadd.xlane.f32.xlu0 %v488
      %v490 = vpop.xlane.xlu0 %489
      %v491 = vadd.f32 %v430, %v432
      %492 = vadd.xlane.f32.xlu0 %v491
      %v493 = vpop.xlane.xlu0 %492
      %v494 = vadd.f32 %v436, %v438
      %495 = vadd.xlane.f32.xlu0 %v494
      %v496 = vpop.xlane.xlu0 %495
      %v497 = vadd.f32 %v440, %v442
      %498 = vadd.xlane.f32.xlu0 %v497
      %v499 = vpop.xlane.xlu0 %498
      %v500 = vadd.f32 %v446, %v448
      %501 = vadd.xlane.f32.xlu0 %v500
      %v502 = vpop.xlane.xlu0 %501
      %v503 = vadd.f32 %v450, %v452
      %504 = vadd.xlane.f32.xlu0 %v503
      %v505 = vpop.xlane.xlu0 %504
      %v506 = vadd.f32 %v456, %v458
      %507 = vadd.xlane.f32.xlu0 %v506
      %v508 = vpop.xlane.xlu0 %507
      %v509 = vadd.f32 %v460, %v462
      %510 = vadd.xlane.f32.xlu0 %v509
      %v511 = vpop.xlane.xlu0 %510
      %v512 = vmul.f32 %v386, %v386
      %v513 = vmul.f32 %v388, %v388
      %v514 = vmul.f32 %v390, %v390
      %v515 = vmul.f32 %v392, %v392
      %v516 = vmul.f32 %v396, %v396
      %v517 = vmul.f32 %v398, %v398
      %v518 = vmul.f32 %v400, %v400
      %v519 = vmul.f32 %v402, %v402
      %v520 = vmul.f32 %v406, %v406
      %v521 = vmul.f32 %v408, %v408
      %v522 = vmul.f32 %v410, %v410
      %v523 = vmul.f32 %v412, %v412
      %v524 = vmul.f32 %v416, %v416
      %v525 = vmul.f32 %v418, %v418
      %v526 = vmul.f32 %v420, %v420
      %v527 = vmul.f32 %v422, %v422
      %v528 = vmul.f32 %v426, %v426
      %v529 = vmul.f32 %v428, %v428
      %v530 = vmul.f32 %v430, %v430
      %v531 = vmul.f32 %v432, %v432
      %v532 = vmul.f32 %v436, %v436
      %v533 = vmul.f32 %v438, %v438
      %v534 = vmul.f32 %v440, %v440
      %v535 = vmul.f32 %v442, %v442
      %v536 = vmul.f32 %v446, %v446
      %v537 = vmul.f32 %v448, %v448
      %v538 = vmul.f32 %v450, %v450
      %v539 = vmul.f32 %v452, %v452
      %v540 = vmul.f32 %v456, %v456
      %v541 = vmul.f32 %v458, %v458
      %v542 = vmul.f32 %v460, %v460
      %v543 = vmul.f32 %v462, %v462
      %v544 = vadd.f32 %v512, %v513
      %545 = vadd.xlane.f32.xlu0 %v544
      %v546 = vpop.xlane.xlu0 %545
      %v547 = vadd.f32 %v514, %v515
      %548 = vadd.xlane.f32.xlu0 %v547
      %v549 = vpop.xlane.xlu0 %548
      %v550 = vadd.f32 %v516, %v517
      %551 = vadd.xlane.f32.xlu0 %v550
      %v552 = vpop.xlane.xlu0 %551
      %v553 = vadd.f32 %v518, %v519
      %554 = vadd.xlane.f32.xlu0 %v553
      %v555 = vpop.xlane.xlu0 %554
      %v556 = vadd.f32 %v520, %v521
      %557 = vadd.xlane.f32.xlu0 %v556
      %v558 = vpop.xlane.xlu0 %557
      %v559 = vadd.f32 %v522, %v523
      %560 = vadd.xlane.f32.xlu0 %v559
      %v561 = vpop.xlane.xlu0 %560
      %v562 = vadd.f32 %v524, %v525
      %563 = vadd.xlane.f32.xlu0 %v562
      %v564 = vpop.xlane.xlu0 %563
      %v565 = vadd.f32 %v526, %v527
      %566 = vadd.xlane.f32.xlu0 %v565
      %v567 = vpop.xlane.xlu0 %566
      %v568 = vadd.f32 %v528, %v529
      %569 = vadd.xlane.f32.xlu0 %v568
      %v570 = vpop.xlane.xlu0 %569
      %v571 = vadd.f32 %v530, %v531
      %572 = vadd.xlane.f32.xlu0 %v571
      %v573 = vpop.xlane.xlu0 %572
      %v574 = vadd.f32 %v532, %v533
      %575 = vadd.xlane.f32.xlu0 %v574
      %v576 = vpop.xlane.xlu0 %575
      %v577 = vadd.f32 %v534, %v535
      %578 = vadd.xlane.f32.xlu0 %v577
      %v579 = vpop.xlane.xlu0 %578
      %v580 = vadd.f32 %v536, %v537
      %581 = vadd.xlane.f32.xlu0 %v580
      %v582 = vpop.xlane.xlu0 %581
      %v583 = vadd.f32 %v538, %v539
      %584 = vadd.xlane.f32.xlu0 %v583
      %v585 = vpop.xlane.xlu0 %584
      %v586 = vadd.f32 %v540, %v541
      %587 = vadd.xlane.f32.xlu0 %v586
      %v588 = vpop.xlane.xlu0 %587
      %v589 = vadd.f32 %v542, %v543
      %590 = vadd.xlane.f32.xlu0 %v589
      %v591 = vpop.xlane.xlu0 %590
      %vm592 = vcmask 7168
      %593 = vst.msk [vmem:[%s222] sm:$0xff] %vm592, %v466
      %594 = vst.msk [vmem:[%s222 + $0x8] sm:$0xff] %vm592, %v469
      %595 = vst.msk [vmem:[%s222 + $0x10] sm:$0xff] %vm592, %v472
      %596 = vst.msk [vmem:[%s222 + $0x18] sm:$0xff] %vm592, %v475
      %597 = vst.msk [vmem:[%s222 + $0x20] sm:$0xff] %vm592, %v478
      %598 = vst.msk [vmem:[%s222 + $0x28] sm:$0xff] %vm592, %v481
      %599 = vst.msk [vmem:[%s222 + $0x30] sm:$0xff] %vm592, %v484
      %600 = vst.msk [vmem:[%s222 + $0x38] sm:$0xff] %vm592, %v487
      %601 = vst.msk [vmem:[%s222 + $0x40] sm:$0xff] %vm592, %v490
      %602 = vst.msk [vmem:[%s222 + $0x48] sm:$0xff] %vm592, %v493
      %603 = vst.msk [vmem:[%s222 + $0x50] sm:$0xff] %vm592, %v496
      %604 = vst.msk [vmem:[%s222 + $0x58] sm:$0xff] %vm592, %v499
      %605 = vst.msk [vmem:[%s222 + $0x60] sm:$0xff] %vm592, %v502
      %606 = vst.msk [vmem:[%s222 + $0x68] sm:$0xff] %vm592, %v505
      %607 = vst.msk [vmem:[%s222 + $0x70] sm:$0xff] %vm592, %v508
      %608 = vst.msk [vmem:[%s222 + $0x78] sm:$0xff] %vm592, %v511
      %609 = vst.msk [vmem:[%s231] sm:$0xff] %vm592, %v546
      %610 = vst.msk [vmem:[%s231 + $0x8] sm:$0xff] %vm592, %v549
      %611 = vst.msk [vmem:[%s231 + $0x10] sm:$0xff] %vm592, %v552
      %612 = vst.msk [vmem:[%s231 + $0x18] sm:$0xff] %vm592, %v555
      %613 = vst.msk [vmem:[%s231 + $0x20] sm:$0xff] %vm592, %v558
      %614 = vst.msk [vmem:[%s231 + $0x28] sm:$0xff] %vm592, %v561
      %615 = vst.msk [vmem:[%s231 + $0x30] sm:$0xff] %vm592, %v564
      %616 = vst.msk [vmem:[%s231 + $0x38] sm:$0xff] %vm592, %v567
      %617 = vst.msk [vmem:[%s231 + $0x40] sm:$0xff] %vm592, %v570
      %618 = vst.msk [vmem:[%s231 + $0x48] sm:$0xff] %vm592, %v573
      %619 = vst.msk [vmem:[%s231 + $0x50] sm:$0xff] %vm592, %v576
      %620 = vst.msk [vmem:[%s231 + $0x58] sm:$0xff] %vm592, %v579
      %621 = vst.msk [vmem:[%s231 + $0x60] sm:$0xff] %vm592, %v582
      %622 = vst.msk [vmem:[%s231 + $0x68] sm:$0xff] %vm592, %v585
      %623 = vst.msk [vmem:[%s231 + $0x70] sm:$0xff] %vm592, %v588
      %624 = vst.msk [vmem:[%s231 + $0x78] sm:$0xff] %vm592, %v591
      %p625 = scmp.lt.s32.totalorder %s19, 1
      %s626 = scalar_select %p625, %s19, 1
      %p627 = scmp.lt.s32.totalorder %s20, 0
      %s628 = scalar_select %p627, %s20, 0
      %s629 = smul.addr %s628, 16
      %s630 = smul.addr %s626, 16
      %s631 = sadd.s32 %s629, %s630
      %s632 = smul.addr %s631, 8
      %s633 = scalar_lea.vmem %s2, %s632
      %p634 = scmp.lt.s32.totalorder %s19, 1
      %s635 = scalar_select %p634, %s19, 1
      %p636 = scmp.lt.s32.totalorder %s20, 0
      %s637 = scalar_select %p636, %s20, 0
      %s638 = smul.addr %s637, 16
      %s639 = smul.addr %s635, 16
      %s640 = sadd.s32 %s638, %s639
      %s641 = smul.addr %s640, 8
      %s642 = scalar_lea.vmem %s3, %s641
      // Predicated region
      $region29: #{conv_bn_relu.2} parent=27 // pred_check
        %p643 = pneg %p96
      $region30: #{conv_bn_relu.2} parent=27 // pred_check_branch
        %645 = sbr.rel (%p643) target = $region32
      $region31: #{conv_bn_relu.2} parent=27 // pred_region
        _
      $region32: #{conv_bn_relu.2} parent=27 // pred_fallthru
        _
      // Predicated region
      $region33: #{conv_bn_relu.2} parent=27 // pred_check
        %p646 = pneg %p124
      $region34: #{conv_bn_relu.2} parent=27 // pred_check_branch
        %648 = sbr.rel (%p646) target = $region36
      $region35: #{conv_bn_relu.2} parent=27 // pred_region
        _
      $region36: #{conv_bn_relu.2} parent=27 // pred_fallthru
        _
    $region28: #{conv_bn_relu.2} parent=5 // pred_fallthru
      _
    %p649 = scmp.le.s32.totalorder 2, %s10
    // Predicated region
    $region37: #{conv_bn_relu.2} parent=5 // pred_check
      %p650 = pneg %p649
    $region38: #{conv_bn_relu.2} parent=5 // pred_check_branch
      %652 = sbr.rel (%p650) target = $region40
    $region39: #{conv_bn_relu.2} parent=5 // pred_region
      %s653 = ssub.s32 %s10, 2
      // Predicated region
      $region41: #{conv_bn_relu.2} parent=39 // pred_check
        %p654 = pneg %p102
      $region42: #{conv_bn_relu.2} parent=39 // pred_check_branch
        %656 = sbr.rel (%p654) target = $region44
      $region43: #{conv_bn_relu.2} parent=39 // pred_region
        %p657 = scmp.lt.s32.totalorder %s21, 1
        %s658 = scalar_select %p657, %s21, 1
        %p659 = scmp.lt.s32.totalorder %s22, 0
        %s660 = scalar_select %p659, %s22, 0
        %s661 = smul.addr %s660, 16
        %s662 = smul.addr %s658, 16
        %s663 = sadd.s32 %s661, %s662
        %s664 = smul.addr %s663, 8
        %s665 = scalar_lea.vmem %s2, %s664
      $region44: #{conv_bn_relu.2} parent=39 // pred_fallthru
        _
      // Predicated region
      $region45: #{conv_bn_relu.2} parent=39 // pred_check
        %p666 = pneg %p130
      $region46: #{conv_bn_relu.2} parent=39 // pred_check_branch
        %668 = sbr.rel (%p666) target = $region48
      $region47: #{conv_bn_relu.2} parent=39 // pred_region
        %p669 = scmp.lt.s32.totalorder %s21, 1
        %s670 = scalar_select %p669, %s21, 1
        %p671 = scmp.lt.s32.totalorder %s22, 0
        %s672 = scalar_select %p671, %s22, 0
        %s673 = smul.addr %s672, 16
        %s674 = smul.addr %s670, 16
        %s675 = sadd.s32 %s673, %s674
        %s676 = smul.addr %s675, 8
        %s677 = scalar_lea.vmem %s3, %s676
      $region48: #{conv_bn_relu.2} parent=39 // pred_fallthru
        _
    $region40: #{conv_bn_relu.2} parent=5 // pred_fallthru
      _
  $region6: #{conv_bn_relu.2} parent=0 // loop_footer
    %s14 = sadd.s32 1, %s10
  $region7: #{conv_bn_relu.2} parent=0 // loop_footer_branch
    %9 = sbr.rel target = $region3
  $region8: #{conv_bn_relu.2} parent=0 // loop_exit
    _

</llo_original>
